<compile_context>
chip_gen: v7x
topology: tpu7x:2x2x1
jax: 0.10.0
libtpu: 0.0.40
codegen_flags: <defaults>
</compile_context>

<pallas_src>
import numpy as np
import jax
import jax.numpy as jnp
from jax.experimental import pallas as pl
from jax.experimental.pallas import tpu as pltpu


# ---------------------------------------------------------------------------
# Kernels
# ---------------------------------------------------------------------------

def _resident_params_kernel(loc_ref, lt_ref, i2v_ref, z_ref, o_ref):
    """Fast path.  loc / log_term / inv_2var: resident (1, col) blocks.
    z / out: streamed (row_tile, col) blocks.  Hot loop is VPU-only."""
    z = z_ref[...].astype(jnp.float32)
    diff = z - loc_ref[...]
    o_ref[...] = (lt_ref[...] - diff * diff * i2v_ref[...]).astype(o_ref.dtype)


def _broadcast_kernel(loc_ref, scale_ref, z_ref, o_ref):
    """General-broadcast fallback: operands kept at natural shapes; the
    broadcast happens in-register via jnp broadcasting on the blocks."""
    loc = loc_ref[...].astype(jnp.float32)
    scale = scale_ref[...].astype(jnp.float32)
    z = z_ref[...].astype(jnp.float32)
    var = scale * scale
    diff = z - loc
    res = -0.5 * jnp.log(2.0 * np.pi * var) - diff * diff * (0.5 / var)
    o_ref[...] = jnp.broadcast_to(res, o_ref.shape).astype(o_ref.dtype)


# ---------------------------------------------------------------------------
# Tiling helpers
# ---------------------------------------------------------------------------

def _round_up(x, m):
    return ((x + m - 1) // m) * m


def _sublane(itemsize):
    # Native sublane count: 8 rows for 4-byte, 16 for 2-byte, 32 for 1-byte.
    return max(8, 32 // max(1, itemsize))


def _vmem_budget():
    """Return (vmem_limit_bytes, target_block_bytes), generation-aware."""
    cap = None
    try:
        cap = getattr(pltpu.get_tpu_info(), "vmem_capacity_bytes", None)
    except Exception:
        cap = None
    kind = ""
    try:
        kind = jax.devices()[0].device_kind.lower()
    except Exception:
        pass
    if cap is None:
        if "v7" in kind or "7x" in kind:
            cap = 64 * 1024 * 1024
        else:
            cap = 128 * 1024 * 1024
    if cap <= 96 * 1024 * 1024:
        # v7x-class TensorCore: 64 MiB VMEM. Keep 2x z + 2x out blocks < 48 MiB.
        return 48 * 1024 * 1024, 10 << 20
    if "v5 lite" in kind or "v5e" in kind:
        # v5e: ~820 GB/s HBM -> ~4 MiB blocks already sit near roofline; the
        # explicit 32 MiB limit is still needed (default scoped VMEM = 16 MiB).
        return 32 * 1024 * 1024, 4 << 20
    # v6e-class (128 MiB VMEM): bigger blocks amortize ~0.35 us/step overhead.
    return 64 * 1024 * 1024, 8 << 20


def _max_block_bytes(itemsize, sub, target_bytes, vmem_limit):
    # 2 buffers for z + 2 buffers for out + resident params must fit.
    return max(sub * 128 * itemsize, min(target_bytes, vmem_limit // 6))


def _choose_col_tile(cols, itemsize, sub, max_block):
    # Full width unless even a minimal-row full-width slab blows the budget;
    # then tile the last dim in multiples of 128 lanes.
    if cols > 128 and sub * cols * itemsize > max_block:
        return int(max(128, ((max_block // (sub * itemsize)) // 128) * 128))
    return int(cols)


def _choose_row_tile(rows, cols, itemsize, sub, max_block):
    by_bytes = max(sub, ((max_block // max(1, cols * itemsize)) // sub) * sub)
    # >= 4 grid steps along rows when possible (>= 2 per TC on v7x megacore).
    quarter = max(sub, ((rows // 4) // sub) * sub)
    row_tile = min(by_bytes, quarter)
    if row_tile >= rows:
        row_tile = rows  # full extent is always a legal block dim
    return int(row_tile)


# ---------------------------------------------------------------------------
# Wrapper
# ---------------------------------------------------------------------------

def normal_log_prob(loc, scale, z):
    """Elementwise Normal log-prob matching torch broadcasting semantics."""
    loc = jnp.asarray(loc)
    scale = jnp.asarray(scale)
    z = jnp.asarray(z)

    out_shape = jnp.broadcast_shapes(loc.shape, scale.shape, z.shape)
    out_dtype = jnp.result_type(loc.dtype, scale.dtype, z.dtype)
    if not jnp.issubdtype(out_dtype, jnp.floating):
        out_dtype = jnp.float32

    vmem_limit, target_bytes = _vmem_budget()
    out_itemsize = np.dtype(out_dtype).itemsize
    itemsize = max(out_itemsize, np.dtype(z.dtype).itemsize)
    sub = _sublane(out_itemsize)
    max_block = _max_block_bytes(itemsize, sub, target_bytes, vmem_limit)

    if len(out_shape) == 0:
        rows, D = 1, 1
    else:
        D = int(out_shape[-1])
        rows = int(np.prod(out_shape[:-1], dtype=np.int64))

    def _params(ndims):
        return pltpu.CompilerParams(
            dimension_semantics=("parallel",) * ndims,
            vmem_limit_bytes=vmem_limit)

    def _last_dim_only(a):
        if a.ndim == 0:
            return True
        return (all(int(s) == 1 for s in a.shape[:-1])
                and int(a.shape[-1]) in (1, D))

    fast = (tuple(z.shape) == tuple(out_shape)
            and _last_dim_only(loc) and _last_dim_only(scale))

    if fast:
        # ---- Fast path: resident params, z-only streaming. ----
        # Lane packing: fold k rows into the lane dim when D < 128 divides 128
        # so streamed/output blocks are lane-dense (unmasked stores).
        packed_k = 1
        if 0 < D < 128 and 128 % D == 0 and rows > 1:
            k0 = 128 // D
            for mult in (4, 2, 1):
                if rows % (k0 * mult) == 0:
                    packed_k = k0 * mult
                    break
        D_p = D * packed_k
        rows_p = rows // packed_k

        # Hoist the log and divide onto the tiny (D,) params (one-time op).
        loc_f = jnp.broadcast_to(loc.reshape(-1).astype(jnp.float32), (D,))
        scale_f = jnp.broadcast_to(scale.reshape(-1).astype(jnp.float32), (D,))
        var = scale_f * scale_f
        log_term = -0.5 * jnp.log(2.0 * np.pi * var)
        inv_2var = 0.5 / var
        if packed_k > 1:
            loc_f = jnp.tile(loc_f, packed_k)
            log_term = jnp.tile(log_term, packed_k)
            inv_2var = jnp.tile(inv_2var, packed_k)
        loc_p = loc_f.reshape(1, D_p)
        lt_p = log_term.reshape(1, D_p)
        i2v_p = inv_2var.reshape(1, D_p)
        z2 = z.reshape(rows_p, D_p)

        col_tile = _choose_col_tile(D_p, itemsize, sub, max_block)
        row_tile = _choose_row_tile(rows_p, col_tile, itemsize, sub, max_block)
        grid = (pl.cdiv(rows_p, row_tile), pl.cdiv(D_p, col_tile))

        param_spec = pl.BlockSpec((1, col_tile), lambda i, j: (0, j))
        stream_spec = pl.BlockSpec((row_tile, col_tile), lambda i, j: (i, j))

        out2 = pl.pallas_call(
            _resident_params_kernel,
            out_shape=jax.ShapeDtypeStruct((rows_p, D_p), out_dtype),
            grid_spec=pltpu.PrefetchScalarGridSpec(
                num_scalar_prefetch=0,
                grid=grid,
                in_specs=[param_spec, param_spec, param_spec, stream_spec],
                out_specs=stream_spec,
            ),
            compiler_params=_params(len(grid)),
        )(loc_p, lt_p, i2v_p, z2)
        return out2.reshape(out_shape)

    # ---- General-broadcast fallback: index_map-based broadcasting (no HBM
    # materialization of broadcast operands). ----
    n = len(out_shape)
    if n < 2:
        # Scalar / 1-D outputs are tiny; materializing the broadcast is free.
        N = int(np.prod(out_shape, dtype=np.int64)) if n else 1
        loc_w = jnp.broadcast_to(loc, out_shape).reshape(1, N)
        scale_w = jnp.broadcast_to(scale, out_shape).reshape(1, N)
        z_w = jnp.broadcast_to(z, out_shape).reshape(1, N)
        work_shape = (1, N)
    else:
        def _pad(a):
            return a.reshape((1,) * (n - a.ndim) + tuple(a.shape))
        loc_w, scale_w, z_w = _pad(loc), _pad(scale), _pad(z)
        work_shape = tuple(int(s) for s in out_shape)

    wn = len(work_shape)
    S, Dw = work_shape[-2], work_shape[-1]
    # TODO(synk): if Dw alone exceeds the per-block VMEM budget, add a column
    # grid axis here as in the fast path (not needed for typical shapes).
    row_tile = _choose_row_tile(S, Dw, itemsize, sub, max_block)
    grid = tuple(work_shape[:-2]) + (pl.cdiv(S, row_tile),)

    def _make_spec(shape):
        shape = tuple(int(s) for s in shape)
        block = [1] * (wn - 2)
        block.append(row_tile if shape[-2] == S else 1)
        block.append(Dw if shape[-1] == Dw else 1)
        bcast = tuple(shape[ax] == 1 and work_shape[ax] != 1
                      for ax in range(wn))

        def imap(*idx):
            out_idx = [0 if bcast[ax] else idx[ax] for ax in range(wn - 1)]
            out_idx.append(0)
            return tuple(out_idx)

        return pl.BlockSpec(tuple(block), imap)

    out_w = pl.pallas_call(
        _broadcast_kernel,
        out_shape=jax.ShapeDtypeStruct(work_shape, out_dtype),
        grid_spec=pltpu.PrefetchScalarGridSpec(
            num_scalar_prefetch=0,
            grid=grid,
            in_specs=[_make_spec(loc_w.shape), _make_spec(scale_w.shape),
                      _make_spec(z_w.shape)],
            out_specs=_make_spec(work_shape),
        ),
        compiler_params=_params(len(grid)),
    )(loc_w, scale_w, z_w)
    return out_w.reshape(out_shape)


# ---------------------------------------------------------------------------
# Self-test
# ---------------------------------------------------------------------------

def _reference(loc, scale, z):
    var = scale.astype(jnp.float32) ** 2
    diff = z.astype(jnp.float32) - loc.astype(jnp.float32)
    return -0.5 * jnp.log(2.0 * np.pi * var) - diff ** 2 / (2.0 * var)


if __name__ == "__main__":
    key = jax.random.PRNGKey(0)
    k_loc, k_scale, k_z = jax.random.split(key, 3)

    def check(loc, scale, z, tol=1e-5):
        out = jax.block_until_ready(normal_log_prob(loc, scale, z))
        expect = jnp.broadcast_to(_reference(loc, scale, z), out.shape)
        np.testing.assert_allclose(np.asarray(out, dtype=np.float32),
                                   np.asarray(expect, dtype=np.float32),
                                   rtol=tol, atol=tol)
        return out

    # 1) Fast path, lane-dense D=128 (typical VAE latent).
    B, S, D = 2, 8, 128
    loc = jax.random.normal(k_loc, (1, 1, D), jnp.float32)
    scale = jax.nn.softplus(
        jax.random.normal(k_scale, (1, 1, D), jnp.float32)) + 1e-3
    z = jax.random.normal(k_z, (B, S, D), jnp.float32)
    out = check(loc, scale, z)
    assert out.shape == (B, S, D)

    # 2) Fast path with lane packing (small latent D=32 -> packed lanes).
    D2 = 32
    loc2 = jax.random.normal(k_loc, (1, 1, D2), jnp.float32)
    scale2 = jax.nn.softplus(
        jax.random.normal(k_scale, (1, 1, D2), jnp.float32)) + 1e-3
    z2 = jax.random.normal(k_z, (4, 8, D2), jnp.float32)
    check(loc2, scale2, z2)

    # 3) Fast path with a ragged last row block (rows % row_tile != 0).
    z3 = jax.random.normal(k_z, (5, 13, D), jnp.float32)
    check(loc, scale, z3)

    # 4) General-broadcast fallback (loc varies over the batch dim).
    loc4 = jax.random.normal(k_loc, (B, 1, D), jnp.float32)
    check(loc4, scale, z)

    print("KERNEL_OK")
</pallas_src>

<mosaic_0001>
module attributes {stable_mosaic.version = 11 : i64} {
  func.func @_resident_params_kernel(%arg0: i32, %arg1: i32, %arg2: memref<1x128xf32, #tpu.memory_space<vmem>>, %arg3: memref<1x128xf32, #tpu.memory_space<vmem>>, %arg4: memref<1x128xf32, #tpu.memory_space<vmem>>, %arg5: memref<8x128xf32, #tpu.memory_space<vmem>>, %arg6: memref<8x128xf32, #tpu.memory_space<vmem>>) attributes {dimension_semantics = [#tpu.dimension_semantics<parallel>, #tpu.dimension_semantics<parallel>], iteration_bounds = array<i64: 2, 1>, scalar_prefetch = 0 : i64, scratch_operands = 0 : i64, tpu.core_type = #tpu.core_type<tc>, window_params = [{transform_indices = @transform_0, window_bounds = array<i64: 1, 128>}, {transform_indices = @transform_1, window_bounds = array<i64: 1, 128>}, {transform_indices = @transform_2, window_bounds = array<i64: 1, 128>}, {transform_indices = @transform_3, window_bounds = array<i64: 8, 128>}, {transform_indices = @transform_4, window_bounds = array<i64: 8, 128>}]} {
    %c0 = arith.constant 0 : index
    %c0_0 = arith.constant 0 : index
    %0 = vector.load %arg5[%c0, %c0_0] : memref<8x128xf32, #tpu.memory_space<vmem>>, vector<8x128xf32>
    %c0_1 = arith.constant 0 : index
    %c0_2 = arith.constant 0 : index
    %1 = vector.load %arg2[%c0_1, %c0_2] : memref<1x128xf32, #tpu.memory_space<vmem>>, vector<1x128xf32>
    %2 = vector.broadcast %1 : vector<1x128xf32> to vector<8x128xf32>
    %3 = arith.subf %0, %2 : vector<8x128xf32>
    %c0_3 = arith.constant 0 : index
    %c0_4 = arith.constant 0 : index
    %4 = vector.load %arg3[%c0_3, %c0_4] : memref<1x128xf32, #tpu.memory_space<vmem>>, vector<1x128xf32>
    %5 = arith.mulf %3, %3 : vector<8x128xf32>
    %c0_5 = arith.constant 0 : index
    %c0_6 = arith.constant 0 : index
    %6 = vector.load %arg4[%c0_5, %c0_6] : memref<1x128xf32, #tpu.memory_space<vmem>>, vector<1x128xf32>
    %7 = vector.broadcast %6 : vector<1x128xf32> to vector<8x128xf32>
    %8 = arith.mulf %5, %7 : vector<8x128xf32>
    %9 = vector.broadcast %4 : vector<1x128xf32> to vector<8x128xf32>
    %10 = arith.subf %9, %8 : vector<8x128xf32>
    %c0_7 = arith.constant 0 : index
    %c0_8 = arith.constant 0 : index
    %11 = vector.load %arg6[%c0_7, %c0_8] : memref<8x128xf32, #tpu.memory_space<vmem>>, vector<8x128xf32>
    tpu.vector_store %arg6[%c0_7, %c0_8], %10 {strides = array<i32>} : memref<8x128xf32, #tpu.memory_space<vmem>>, vector<8x128xf32>,
    return
  }
  func.func @transform_0(%arg0: i32, %arg1: i32) -> (i32, i32) {
    %c0_i32 = arith.constant 0 : i32
    %c0_i32_0 = arith.constant 0 : i32
    return %c0_i32, %arg1 : i32, i32
  }
  func.func @transform_1(%arg0: i32, %arg1: i32) -> (i32, i32) {
    %c0_i32 = arith.constant 0 : i32
    %c0_i32_0 = arith.constant 0 : i32
    return %c0_i32, %arg1 : i32, i32
  }
  func.func @transform_2(%arg0: i32, %arg1: i32) -> (i32, i32) {
    %c0_i32 = arith.constant 0 : i32
    %c0_i32_0 = arith.constant 0 : i32
    return %c0_i32, %arg1 : i32, i32
  }
  func.func @transform_3(%arg0: i32, %arg1: i32) -> (i32, i32) {
    %c0_i32 = arith.constant 0 : i32
    return %arg0, %arg1 : i32, i32
  }
  func.func @transform_4(%arg0: i32, %arg1: i32) -> (i32, i32) {
    %c0_i32 = arith.constant 0 : i32
    return %arg0, %arg1 : i32, i32
  }
}

</mosaic_0001>

<llo_original>
// kernel: tpu_custom_call.1
$region0: #{tpu_custom_call.1}
  #allocation0 [shape = 'u32[]', space=smem, size = 0x4, offset = 0x4, fixed_abs, tag = 'smem constant byte address 0x4 - core index']
  #allocation1 [shape = 'u32[144,128]{1,0:T(1,128)}', space=vmem, size = 0x12000, scoped, tag = 'internal scratch']
  %s0 = inlined_call_operand.hbm [shape: f32[1,128], index: 0, kind: input, shape index: {}]
  %s1 = inlined_call_operand.hbm [shape: f32[1,128], index: 1, kind: input, shape index: {}]
  %s2 = inlined_call_operand.hbm [shape: f32[1,128], index: 2, kind: input, shape index: {}]
  %s3 = inlined_call_operand.hbm [shape: f32[16,128], index: 3, kind: input, shape index: {}]
  %s4 = inlined_call_operand.hbm [shape: f32[16,128], index: 4, kind: output, shape index: {}]
  %s5 = sld [smem:[#allocation0]]
  $region65: #{tpu_custom_call.1} parent=0
    _
  %s7 = ssub.s32 1, %s5
  %s8 = scalar_select 0, %s7, %s5
  $region1: #{tpu_custom_call.1} parent=0
    #allocation2 [shape = 'u8[512]{0}', space=vmem, size = 0x400, scoped, tag = 'input window, operand 0, single buffered']
    #allocation3 [shape = 's32[2]{0}', space=sflag, size = 0x8, scoped, tag = 'scoped memory for tpu_custom_call.1']
    #allocation4 [shape = 's32[2]{0}', space=sflag, size = 0x8, scoped, tag = 'scoped memory for tpu_custom_call.1']
    #allocation5 [shape = 'u8[512]{0}', space=vmem, size = 0x400, scoped, tag = 'input window, operand 1, single buffered']
    #allocation6 [shape = 's32[1]{0}', space=sflag, size = 0x4, scoped, tag = 'scoped memory for tpu_custom_call.1']
    #allocation7 [shape = 'u8[512]{0}', space=vmem, size = 0x400, scoped, tag = 'input window, operand 2, single buffered']
    #allocation8 [shape = 'u8[8192]{0}', space=vmem, size = 0x2000, scoped, tag = 'input window, operand 3']
    #allocation9 [shape = 's32[2]{0}', space=sflag, size = 0x8, scoped, tag = 'scoped memory for tpu_custom_call.1']
    #allocation10 [shape = 'u8[8192]{0}', space=vmem, size = 0x2000, scoped, tag = 'output window, operand 0']
    %9 = vsyncpa [#allocation3], 0
    %10 = vsyncpa [#allocation6], 0
    %11 = vsyncpa [#allocation9], 0
    %s12 = scalar_lea.sflag [#allocation9], 1
    %13 = vsyncpa %s12, 0
    %14 = vsyncpa [#allocation4], 0
    %s15 = scalar_lea.sflag [#allocation4], 1
    %16 = vsyncpa %s15, 0
    loop: start=0, step=1, limit=4
    $region2: #{tpu_custom_call.1} parent=1 // loop_pre_header
      _
    $region3: #{tpu_custom_call.1} parent=1 // loop_header
      %s18 = sphi 0, %s22
      %p19 = scmp.ge.s32.totalorder %s18, 4
      %s25 = sphi 0, %s37
      %s26 = sphi 0, %s33
      %s27 = sphi 0, %s25
      %s28 = sphi 0, %s26
      %s29 = sphi 0, %s27
      %s30 = sphi 0, %s28
      %s40 = sphi 0, %s42
      %s43 = sphi 0, %s40
      %s44 = sphi 0, %s43
      %s60 = sphi 0, %s44
      %s66 = sphi 0, %s68
      %s69 = sphi 0, %s66
      %s70 = sphi 0, %s69
      %s86 = sphi 0, %s70
      %s92 = sphi 0, %s94
      %s95 = sphi 0, %s92
      %s96 = sphi 0, %s95
      %s112 = sphi 0, %s96
      %s120 = sphi 0, %s122
      %s123 = sphi 0, %s120
      %s124 = sphi 0, %s123
      %s140 = sphi 0, %s124
      %s148 = sphi 0, %s150
      %s151 = sphi 0, %s148
      %s152 = sphi 0, %s151
      %s168 = sphi 0, %s152
    $region4: #{tpu_custom_call.1} parent=1 // loop_header_branch
      %21 = sbr.rel (%p19) target = $region8
    $region5: #{tpu_custom_call.1} parent=1 // loop_body
      %s23 = ssub.s32 %s18, 1
      %s24 = ssub.s32 %s18, 2
      %s31 = sadd.s32 1, %s26
      %p32 = scmp.ge.s32.totalorder %s31, 1
      %s33 = scalar_select %p32, 0, %s31
      %s34 = sadd.s32 1, %s25
      %s35 = scalar_select %p32, %s34, %s25
      %p36 = scmp.ge.s32.totalorder %s35, 2
      %s37 = scalar_select %p36, 0, %s35
      %s38 = ssub.s32 %s26, %s33
      %p39 = scmp.eq.s32.totalorder %s38, 0
      %s41 = sadd.s32 %s40, 1
      %s42 = scalar_select %p39, %s40, %s41
      %p45 = pneg %p39
      %p46 = scmp.eq.s32.totalorder %s18, 1
      %p47 = por %p45, %p46
      %p48 = scmp.ne.s32.totalorder %s40, %s43
      %p49 = scmp.eq.s32.totalorder %s18, 0
      %p50 = por %p48, %p49
      %p51 = scmp.ne.s32.totalorder %s40, %s43
      %p52 = scmp.eq.s32.totalorder %s23, 1
      %p53 = por %p51, %p52
      %p54 = scmp.ne.s32.totalorder %s43, %s44
      %p55 = scmp.eq.s32.totalorder %s23, 0
      %p56 = por %p54, %p55
      %p57 = scmp.ne.s32.totalorder %s43, %s44
      %p58 = scmp.eq.s32.totalorder %s24, 1
      %p59 = por %p57, %p58
      %p61 = scmp.ne.s32.totalorder %s44, %s60
      %p62 = scmp.eq.s32.totalorder %s24, 0
      %p63 = por %p61, %p62
      %s64 = ssub.s32 %s26, %s33
      %p65 = scmp.eq.s32.totalorder %s64, 0
      %s67 = sadd.s32 %s66, 1
      %s68 = scalar_select %p65, %s66, %s67
      %p71 = pneg %p65
      %p72 = scmp.eq.s32.totalorder %s18, 1
      %p73 = por %p71, %p72
      %p74 = scmp.ne.s32.totalorder %s66, %s69
      %p75 = scmp.eq.s32.totalorder %s18, 0
      %p76 = por %p74, %p75
      %p77 = scmp.ne.s32.totalorder %s66, %s69
      %p78 = scmp.eq.s32.totalorder %s23, 1
      %p79 = por %p77, %p78
      %p80 = scmp.ne.s32.totalorder %s69, %s70
      %p81 = scmp.eq.s32.totalorder %s23, 0
      %p82 = por %p80, %p81
      %p83 = scmp.ne.s32.totalorder %s69, %s70
      %p84 = scmp.eq.s32.totalorder %s24, 1
      %p85 = por %p83, %p84
      %p87 = scmp.ne.s32.totalorder %s70, %s86
      %p88 = scmp.eq.s32.totalorder %s24, 0
      %p89 = por %p87, %p88
      %s90 = ssub.s32 %s26, %s33
      %p91 = scmp.eq.s32.totalorder %s90, 0
      %s93 = sadd.s32 %s92, 1
      %s94 = scalar_select %p91, %s92, %s93
      %p97 = pneg %p91
      %p98 = scmp.eq.s32.totalorder %s18, 1
      %p99 = por %p97, %p98
      %p100 = scmp.ne.s32.totalorder %s92, %s95
      %p101 = scmp.eq.s32.totalorder %s18, 0
      %p102 = por %p100, %p101
      %p103 = scmp.ne.s32.totalorder %s92, %s95
      %p104 = scmp.eq.s32.totalorder %s23, 1
      %p105 = por %p103, %p104
      %p106 = scmp.ne.s32.totalorder %s95, %s96
      %p107 = scmp.eq.s32.totalorder %s23, 0
      %p108 = por %p106, %p107
      %p109 = scmp.ne.s32.totalorder %s95, %s96
      %p110 = scmp.eq.s32.totalorder %s24, 1
      %p111 = por %p109, %p110
      %p113 = scmp.ne.s32.totalorder %s96, %s112
      %p114 = scmp.eq.s32.totalorder %s24, 0
      %p115 = por %p113, %p114
      %s116 = ssub.s32 %s25, %s37
      %s117 = ssub.s32 %s26, %s33
      %s118 = sor.u32 %s116, %s117
      %p119 = scmp.eq.s32.totalorder %s118, 0
      %s121 = sadd.s32 %s120, 1
      %s122 = scalar_select %p119, %s120, %s121
      %p125 = pneg %p119
      %p126 = scmp.eq.s32.totalorder %s18, 1
      %p127 = por %p125, %p126
      %p128 = scmp.ne.s32.totalorder %s120, %s123
      %p129 = scmp.eq.s32.totalorder %s18, 0
      %p130 = por %p128, %p129
      %p131 = scmp.ne.s32.totalorder %s120, %s123
      %p132 = scmp.eq.s32.totalorder %s23, 1
      %p133 = por %p131, %p132
      %p134 = scmp.ne.s32.totalorder %s123, %s124
      %p135 = scmp.eq.s32.totalorder %s23, 0
      %p136 = por %p134, %p135
      %p137 = scmp.ne.s32.totalorder %s123, %s124
      %p138 = scmp.eq.s32.totalorder %s24, 1
      %p139 = por %p137, %p138
      %p141 = scmp.ne.s32.totalorder %s124, %s140
      %p142 = scmp.eq.s32.totalorder %s24, 0
      %p143 = por %p141, %p142
      %s144 = ssub.s32 %s25, %s37
      %s145 = ssub.s32 %s26, %s33
      %s146 = sor.u32 %s144, %s145
      %p147 = scmp.eq.s32.totalorder %s146, 0
      %s149 = sadd.s32 %s148, 1
      %s150 = scalar_select %p147, %s148, %s149
      %p153 = pneg %p147
      %p154 = scmp.eq.s32.totalorder %s18, 1
      %p155 = por %p153, %p154
      %p156 = scmp.ne.s32.totalorder %s148, %s151
      %p157 = scmp.eq.s32.totalorder %s18, 0
      %p158 = por %p156, %p157
      %p159 = scmp.ne.s32.totalorder %s148, %s151
      %p160 = scmp.eq.s32.totalorder %s23, 1
      %p161 = por %p159, %p160
      %p162 = scmp.ne.s32.totalorder %s151, %s152
      %p163 = scmp.eq.s32.totalorder %s23, 0
      %p164 = por %p162, %p163
      %p165 = scmp.ne.s32.totalorder %s151, %s152
      %p166 = scmp.eq.s32.totalorder %s24, 1
      %p167 = por %p165, %p166
      %p169 = scmp.ne.s32.totalorder %s152, %s168
      %p170 = scmp.eq.s32.totalorder %s24, 0
      %p171 = por %p169, %p170
      %p172 = scmp.le.s32.totalorder 1, %s18
      %p173 = scmp.lt.s32.totalorder %s18, 3
      %p174 = pnand %p172, %p173
      %p175 = pneg %p174
      // Predicated region
      $region9: #{tpu_custom_call.1} parent=5 // pred_check
        _
      $region10: #{tpu_custom_call.1} parent=5 // pred_check_branch
        %177 = sbr.rel (%p174) target = $region12
      $region11: #{tpu_custom_call.1} parent=5 // pred_region
        %s178 = ssub.s32 %s18, 1
        // Predicated region
        $region13: #{tpu_custom_call.1} parent=11 // pred_check
          %p179 = pneg %p56
        $region14: #{tpu_custom_call.1} parent=11 // pred_check_branch
          %181 = sbr.rel (%p179) target = $region16
        $region15: #{tpu_custom_call.1} parent=11 // pred_region
          %s183 = ssub.s32 16, 16
          %184 = vsyncadd [#allocation3], %s183
          %s185 = smul.addr %s28, 16
          %s186 = scalar_lea.hbm %s0, %s185
          %s188 = sshll.u32 [#allocation2], 4
          %s189 = int_to_ptr.vmem [resolvable:$true] %s188
          %191 = dma.hbm_to_vmem [thread:$0]  %s186, 16, %s189, [#allocation3]
        $region16: #{tpu_custom_call.1} parent=11 // pred_fallthru
          _
        // Predicated region
        $region17: #{tpu_custom_call.1} parent=11 // pred_check
          %p192 = pneg %p82
        $region18: #{tpu_custom_call.1} parent=11 // pred_check_branch
          %194 = sbr.rel (%p192) target = $region20
        $region19: #{tpu_custom_call.1} parent=11 // pred_region
          %s196 = ssub.s32 16, 16
          %197 = vsyncadd [#allocation6], %s196
          %s198 = smul.addr %s28, 16
          %s199 = scalar_lea.hbm %s1, %s198
          %s201 = sshll.u32 [#allocation5], 4
          %s202 = int_to_ptr.vmem [resolvable:$true] %s201
          %204 = dma.hbm_to_vmem [thread:$0]  %s199, 16, %s202, [#allocation6]
        $region20: #{tpu_custom_call.1} parent=11 // pred_fallthru
          _
        // Predicated region
        $region21: #{tpu_custom_call.1} parent=11 // pred_check
          %p205 = pneg %p108
        $region22: #{tpu_custom_call.1} parent=11 // pred_check_branch
          %207 = sbr.rel (%p205) target = $region24
        $region23: #{tpu_custom_call.1} parent=11 // pred_region
          %s209 = ssub.s32 16, 16
          %210 = vsyncadd [#allocation6], %s209
          %s211 = smul.addr %s28, 16
          %s212 = scalar_lea.hbm %s2, %s211
          %s214 = sshll.u32 [#allocation7], 4
          %s215 = int_to_ptr.vmem [resolvable:$true] %s214
          %217 = dma.hbm_to_vmem [thread:$0]  %s212, 16, %s215, [#allocation6]
        $region24: #{tpu_custom_call.1} parent=11 // pred_fallthru
          _
      $region12: #{tpu_custom_call.1} parent=5 // pred_fallthru
        _
      %p218 = scmp.lt.s32.totalorder %s18, 2
      // Predicated region
      $region25: #{tpu_custom_call.1} parent=5 // pred_check
        %p219 = pneg %p218
      $region26: #{tpu_custom_call.1} parent=5 // pred_check_branch
        %221 = sbr.rel (%p219) target = $region28
      $region27: #{tpu_custom_call.1} parent=5 // pred_region
        // Predicated region
        $region29: #{tpu_custom_call.1} parent=27 // pred_check
          %p222 = pneg %p130
        $region30: #{tpu_custom_call.1} parent=27 // pred_check_branch
          %224 = sbr.rel (%p222) target = $region32
        $region31: #{tpu_custom_call.1} parent=27 // pred_region
          %s225 = sand.u32 %s120, 1
          %s226 = scalar_lea.sflag [#allocation9], %s225
          %s227 = sand.u32 %s120, 1
          %s228 = smul.addr %s227, 8
          %s229 = scalar_lea.vmem [#allocation8], %s228
          %s231 = ssub.s32 128, 128
          %232 = vsyncadd %s226, %s231
          %s233 = sadd.s32 %s26, %s25
          %s234 = smul.addr %s233, 128
          %s235 = scalar_lea.hbm %s3, %s234
          %s237 = sshll.u32 %s229, 4
          %s238 = int_to_ptr.vmem [resolvable:$true] %s237
          %240 = dma.hbm_to_vmem [thread:$0]  %s235, 128, %s238, %s226
        $region32: #{tpu_custom_call.1} parent=27 // pred_fallthru
          _
      $region28: #{tpu_custom_call.1} parent=5 // pred_fallthru
        _
      %p241 = scmp.le.s32.totalorder 1, %s18
      %p242 = scmp.lt.s32.totalorder %s18, 3
      %p243 = pnand %p241, %p242
      %p244 = pneg %p243
      // Predicated region
      $region33: #{tpu_custom_call.1} parent=5 // pred_check
        _
      $region34: #{tpu_custom_call.1} parent=5 // pred_check_branch
        %246 = sbr.rel (%p243) target = $region36
      $region35: #{tpu_custom_call.1} parent=5 // pred_region
        %s247 = ssub.s32 %s18, 1
        // Predicated region
        $region37: #{tpu_custom_call.1} parent=35 // pred_check
          %p248 = pneg %p56
        $region38: #{tpu_custom_call.1} parent=35 // pred_check_branch
          %250 = sbr.rel (%p248) target = $region40
        $region39: #{tpu_custom_call.1} parent=35 // pred_region
          %251 = dma.done [#allocation3], 16
        $region40: #{tpu_custom_call.1} parent=35 // pred_fallthru
          _
        // Predicated region
        $region41: #{tpu_custom_call.1} parent=35 // pred_check
          %p252 = pneg %p82
        $region42: #{tpu_custom_call.1} parent=35 // pred_check_branch
          %254 = sbr.rel (%p252) target = $region44
        $region43: #{tpu_custom_call.1} parent=35 // pred_region
          %255 = dma.done [#allocation6], 16
        $region44: #{tpu_custom_call.1} parent=35 // pred_fallthru
          _
        // Predicated region
        $region45: #{tpu_custom_call.1} parent=35 // pred_check
          %p256 = pneg %p108
        $region46: #{tpu_custom_call.1} parent=35 // pred_check_branch
          %258 = sbr.rel (%p256) target = $region48
        $region47: #{tpu_custom_call.1} parent=35 // pred_region
          %259 = dma.done [#allocation6], 16
        $region48: #{tpu_custom_call.1} parent=35 // pred_fallthru
          _
        %s260 = sand.u32 %s123, 1
        %s261 = scalar_lea.sflag [#allocation9], %s260
        %s262 = sand.u32 %s123, 1
        %s263 = smul.addr %s262, 8
        %s264 = scalar_lea.vmem [#allocation8], %s263
        // Predicated region
        $region49: #{tpu_custom_call.1} parent=35 // pred_check
          %p265 = pneg %p136
        $region50: #{tpu_custom_call.1} parent=35 // pred_check_branch
          %267 = sbr.rel (%p265) target = $region52
        $region51: #{tpu_custom_call.1} parent=35 // pred_region
          %268 = dma.done %s261, 128
        $region52: #{tpu_custom_call.1} parent=35 // pred_fallthru
          _
        %p269 = pneg %p56
        %p270 = pneg %p53
        %p271 = pneg %p82
        %p272 = pneg %p79
        %p273 = pneg %p108
        %p274 = pneg %p105
        %s275 = sand.u32 %s123, 1
        %s276 = scalar_lea.sflag [#allocation9], %s275
        %s277 = sand.u32 %s123, 1
        %s278 = smul.addr %s277, 8
        %s279 = scalar_lea.vmem [#allocation8], %s278
        %p280 = pneg %p136
        %p281 = pneg %p133
        %p282 = pneg %p164
        %p283 = pneg %p161
        %s284 = sand.u32 %s151, 1
        %s285 = scalar_lea.sflag [#allocation4], %s284
        %s286 = sand.u32 %s151, 1
        %s287 = smul.addr %s286, 8
        %s288 = scalar_lea.vmem [#allocation10], %s287
        %v289 = vld [vmem:[%s264] sm:$0xff]
        %v290 = vld [vmem:[#allocation2] sm:$0x1]
        %v292 = vlaneseq
        %v293 = vshrl.u32 %v292, 7
        %v294 = vsub.s32 0, %v293
        %v295 = vrot.slane %v290, %v294
        %v297 = vsub.f32 %v289, %v295
        %v298 = vld [vmem:[#allocation5] sm:$0x1]
        %v299 = vmul.f32 %v297, %v297
        %v300 = vld [vmem:[#allocation7] sm:$0x1]
        %v302 = vlaneseq
        %v303 = vshrl.u32 %v302, 7
        %v304 = vsub.s32 0, %v303
        %v305 = vrot.slane %v300, %v304
        %v307 = vmul.f32 %v299, %v305
        %v309 = vlaneseq
        %v310 = vshrl.u32 %v309, 7
        %v311 = vsub.s32 0, %v310
        %v312 = vrot.slane %v298, %v311
        %v314 = vsub.f32 %v312, %v307
        %315 = vst [vmem:[%s288] sm:$0xff] %v314
        %s316 = sand.u32 %s151, 1
        %s317 = scalar_lea.sflag [#allocation4], %s316
        %s318 = sand.u32 %s151, 1
        %s319 = smul.addr %s318, 8
        %s320 = scalar_lea.vmem [#allocation10], %s319
        // Predicated region
        $region53: #{tpu_custom_call.1} parent=35 // pred_check
          %p321 = pneg %p161
        $region54: #{tpu_custom_call.1} parent=35 // pred_check_branch
          %323 = sbr.rel (%p321) target = $region56
        $region55: #{tpu_custom_call.1} parent=35 // pred_region
          %s325 = ssub.s32 128, 128
          %326 = vsyncadd %s317, %s325
          %s327 = sadd.s32 %s28, %s27
          %s328 = smul.addr %s327, 128
          %s329 = scalar_lea.hbm %s4, %s328
          %s331 = sshll.u32 %s320, 4
          %s332 = int_to_ptr.vmem [resolvable:$true] %s331
          %334 = dma.vmem_to_hbm [thread:$0]  %s332, 128, %s329, %s317
        $region56: #{tpu_custom_call.1} parent=35 // pred_fallthru
          _
      $region36: #{tpu_custom_call.1} parent=5 // pred_fallthru
        _
      %p335 = scmp.le.s32.totalorder 2, %s18
      // Predicated region
      $region57: #{tpu_custom_call.1} parent=5 // pred_check
        %p336 = pneg %p335
      $region58: #{tpu_custom_call.1} parent=5 // pred_check_branch
        %338 = sbr.rel (%p336) target = $region60
      $region59: #{tpu_custom_call.1} parent=5 // pred_region
        %s339 = ssub.s32 %s18, 2
        // Predicated region
        $region61: #{tpu_custom_call.1} parent=59 // pred_check
          %p340 = pneg %p167
        $region62: #{tpu_custom_call.1} parent=59 // pred_check_branch
          %342 = sbr.rel (%p340) target = $region64
        $region63: #{tpu_custom_call.1} parent=59 // pred_region
          %s343 = sand.u32 %s152, 1
          %s344 = scalar_lea.sflag [#allocation4], %s343
          %s345 = sand.u32 %s152, 1
          %s346 = smul.addr %s345, 8
          %s347 = scalar_lea.vmem [#allocation10], %s346
          %348 = dma.done %s344, 128
        $region64: #{tpu_custom_call.1} parent=59 // pred_fallthru
          _
      $region60: #{tpu_custom_call.1} parent=5 // pred_fallthru
        _
    $region6: #{tpu_custom_call.1} parent=1 // loop_footer
      %s22 = sadd.s32 1, %s18
    $region7: #{tpu_custom_call.1} parent=1 // loop_footer_branch
      %17 = sbr.rel target = $region3
    $region8: #{tpu_custom_call.1} parent=1 // loop_exit
      _
    %349 = vsyncpa [#allocation3], 1
    %s350 = scalar_lea.sflag [#allocation3], 1
    %351 = vsyncpa %s350, 1
    %352 = vsyncpa [#allocation6], 1
    %353 = vsyncpa [#allocation9], 1
    %s354 = scalar_lea.sflag [#allocation9], 1
    %355 = vsyncpa %s354, 1
    %356 = vsyncpa [#allocation4], 1
    %s357 = scalar_lea.sflag [#allocation4], 1
    %358 = vsyncpa %s357, 1

</llo_original>
